<compile_context>
chip_gen: v7x
topology: tpu7x:2x2x1
jax: 0.10.0
libtpu: 0.0.40
codegen_flags: <defaults>
</compile_context>

<pallas_src>
import functools

import jax
import jax.numpy as jnp
from jax.experimental import pallas as pl
from jax.experimental.pallas import tpu as pltpu


def _round_up(x, m):
    return ((x + m - 1) // m) * m


def _label_smoothing_kernel(pred_ref, tgt_ref, out_ref, acc_ref, *, classes,
                            smoothing, n_rows, tile_n, tiles_per_split,
                            need_row_mask):
    confidence = jnp.float32(1.0 - smoothing)
    smooth_val = jnp.float32(smoothing / (classes - 1) if classes > 1 else 0.0)

    step = pl.program_id(1)

    pred = pred_ref[...].astype(jnp.float32)       # (tile_n, C) f32
    tgt = tgt_ref[...]                             # (tile_n, 1) int32
    tn, c = pred.shape                             # static

    cls_ids = jax.lax.broadcasted_iota(jnp.int32, (tn, c), 1)

    # Numerically stable log-softmax pieces (class axis = lanes).
    m = jnp.max(pred, axis=-1, keepdims=True)                          # (tn,1)
    shifted = pred - m
    lse = jnp.log(jnp.sum(jnp.exp(shifted), axis=-1, keepdims=True))   # (tn,1)

    # loss_row = -sum_c td_c * (shifted_c - lse) = lse - sum_c td_c * shifted_c
    # because sum_c td_c == smoothing + confidence == 1 exactly.
    w = jnp.where(cls_ids == tgt, confidence, smooth_val)              # (tn,C)
    per_row = lse - jnp.sum(w * shifted, axis=-1, keepdims=True)       # (tn,1)

    # Mask rows past the true batch size (ragged last tile / duplicated tile of
    # an idle split).  Must stay immediately before the tile reduction.
    if need_row_mask:
        global_tile = pl.program_id(0) * tiles_per_split + step
        row_ids = (global_tile * tile_n
                   + jax.lax.broadcasted_iota(jnp.int32, (tn, 1), 0))
        per_row = jnp.where(row_ids < n_rows, per_row, 0.0)

    @pl.when(step == 0)
    def _():
        acc_ref[...] = jnp.zeros_like(acc_ref)

    acc_ref[...] += jnp.sum(per_row, axis=0, keepdims=True)            # (1,1)

    @pl.when(step == pl.num_programs(1) - 1)
    def _():
        out_ref[...] = acc_ref[...]

    # TODO(synk): per-class `weight` path (weight.gather(0, target)) not wired;
    # module default is weight=None.
    # TODO(synk): accumulating in an SMEM scalar (scalar path) would shave a
    # sub-microsecond per step; kept on the vector path for lowering safety.


def label_smoothing_loss(pred, target, *, classes, smoothing=0.1,
                         block_rows=None):
    """pred: (N, C) float32/bf16, target: (N,) int. Returns scalar f32 loss.

    `block_rows` optionally overrides the batch-tile size (testing/tuning).
    """
    n, c = pred.shape
    assert c == classes

    tgt2d = target.astype(jnp.int32).reshape(n, 1)

    # ---- tile sizing (byte-based, no fixed row cap) -------------------------
    itemsize = jnp.dtype(pred.dtype).itemsize
    c_phys = _round_up(c, 128)          # lanes the VMEM tile physically spans
    if block_rows is None:
        dma_target = 4 * 1024 * 1024    # per DMA buffer (~2-8 MiB sweet spot)
        ws_budget = 40 * 1024 * 1024    # double buffer + ~6 full-tile f32 temps
        rows_dma = dma_target // (c_phys * itemsize)
        rows_ws = ws_budget // (c_phys * (2 * itemsize + 6 * 4))
        budget_rows = max(8, (min(rows_dma, rows_ws) // 8) * 8)
    else:
        budget_rows = max(8, (int(block_rows) // 8) * 8)
    # TODO(synk): for extremely wide class dims an inner C-tile grid axis with
    # an online logsumexp would be required.

    if n % 8 == 0:
        tile_n = int(min(budget_rows, n))
    elif n < 8:
        tile_n = n                       # block dim == full array dim (legal)
    else:
        tile_n = int(min(budget_rows, (n // 8) * 8))

    n_tiles = pl.cdiv(n, tile_n)
    # Two-way split on a leading "parallel" axis: shards across the 2 TCs on
    # v7x, serialized (harmless) on v5e/v6e.
    n_splits = 2 if n_tiles >= 2 else 1
    tiles_per_split = pl.cdiv(n_tiles, n_splits)

    if n_splits * tiles_per_split == n_tiles:
        idx_map = lambda s, i: (s * tiles_per_split + i, 0)
    else:
        # Clamp so the DMA stays in bounds for the duplicated tile of an idle
        # split; the kernel masks it out via the *unclamped* global row index.
        idx_map = lambda s, i: (jnp.minimum(s * tiles_per_split + i,
                                            n_tiles - 1), 0)

    need_row_mask = (n_splits * tiles_per_split * tile_n) != n

    kernel = functools.partial(
        _label_smoothing_kernel, classes=classes, smoothing=smoothing,
        n_rows=n, tile_n=tile_n, tiles_per_split=tiles_per_split,
        need_row_mask=need_row_mask)

    partials = pl.pallas_call(
        kernel,
        out_shape=jax.ShapeDtypeStruct((n_splits, 1), jnp.float32),
        grid_spec=pltpu.PrefetchScalarGridSpec(
            num_scalar_prefetch=0,
            grid=(n_splits, tiles_per_split),
            in_specs=[
                pl.BlockSpec((tile_n, c), idx_map),   # pred tile, unpadded C
                pl.BlockSpec((tile_n, 1), idx_map),   # targets
            ],
            out_specs=pl.BlockSpec((1, 1), lambda s, i: (s, 0)),  # per-split acc
            scratch_shapes=[pltpu.VMEM((1, 1), jnp.float32)],
        ),
        compiler_params=pltpu.CompilerParams(
            dimension_semantics=("parallel", "arbitrary"),
            vmem_limit_bytes=48 * 1024 * 1024),
    )(pred, tgt2d)

    return jnp.sum(partials) / jnp.float32(n)


def _reference(pred, target, *, classes, smoothing):
    confidence = 1.0 - smoothing
    logp = jax.nn.log_softmax(pred.astype(jnp.float32), axis=-1)
    true_dist = jnp.full_like(logp, smoothing / (classes - 1))
    true_dist = true_dist.at[jnp.arange(pred.shape[0]), target].set(confidence)
    return jnp.mean(-jnp.sum(true_dist * logp, axis=-1))


if __name__ == "__main__":
    key = jax.random.PRNGKey(0)
    smoothing = 0.1
    k1, k2, k3, k4, k5, k6 = jax.random.split(key, 6)

    # Test 1: small shapes matching the module spec (single tile, C < 128).
    N, C = 8, 16
    pred = jax.random.normal(k1, (N, C), dtype=jnp.float32)
    target = jax.random.randint(k2, (N,), 0, C, dtype=jnp.int32)
    loss = label_smoothing_loss(pred, target, classes=C, smoothing=smoothing)
    jax.block_until_ready(loss)
    ref = _reference(pred, target, classes=C, smoothing=smoothing)
    assert jnp.allclose(loss, ref, atol=1e-4, rtol=1e-4), (loss, ref)

    # Test 2: multi-tile batch, 2-way split (even tiles), ragged last tile,
    # non-128-multiple class count (exercises tiling + accumulation + masking).
    N2, C2 = 200, 37
    pred2 = jax.random.normal(k3, (N2, C2), dtype=jnp.float32)
    target2 = jax.random.randint(k4, (N2,), 0, C2, dtype=jnp.int32)
    loss2 = label_smoothing_loss(pred2, target2, classes=C2,
                                 smoothing=smoothing, block_rows=64)
    jax.block_until_ready(loss2)
    ref2 = _reference(pred2, target2, classes=C2, smoothing=smoothing)
    assert jnp.allclose(loss2, ref2, atol=1e-4, rtol=1e-4), (loss2, ref2)

    # Test 3: bf16 input, odd tile count (exercises the clamped duplicate tile
    # of the second split) and C > 128 but not a multiple of 128.
    N3, C3 = 88, 130
    pred3 = jax.random.normal(k5, (N3, C3), dtype=jnp.float32).astype(jnp.bfloat16)
    target3 = jax.random.randint(k6, (N3,), 0, C3, dtype=jnp.int32)
    loss3 = label_smoothing_loss(pred3, target3, classes=C3,
                                 smoothing=smoothing, block_rows=32)
    jax.block_until_ready(loss3)
    ref3 = _reference(pred3, target3, classes=C3, smoothing=smoothing)
    assert jnp.allclose(loss3, ref3, atol=1e-3, rtol=1e-3), (loss3, ref3)

    print("KERNEL_OK")
</pallas_src>

<mosaic_0001>
module attributes {stable_mosaic.version = 11 : i64} {
  func.func @_label_smoothing_kernel(%arg0: i32, %arg1: i32, %arg2: memref<8x16xf32, #tpu.memory_space<vmem>>, %arg3: memref<8x1xi32, #tpu.memory_space<vmem>>, %arg4: memref<1x1xf32, #tpu.memory_space<vmem>>, %arg5: memref<1x1xf32, #tpu.memory_space<vmem>>) attributes {dimension_semantics = [#tpu.dimension_semantics<parallel>, #tpu.dimension_semantics<arbitrary>], iteration_bounds = array<i64: 1, 1>, scalar_prefetch = 0 : i64, scratch_operands = 1 : i64, tpu.core_type = #tpu.core_type<tc>, window_params = [{transform_indices = @transform_0, window_bounds = array<i64: 8, 16>}, {transform_indices = @transform_1, window_bounds = array<i64: 8, 1>}, {transform_indices = @transform_2, window_bounds = array<i64: 1, 1>}]} {
    %c0 = arith.constant 0 : index
    %c0_0 = arith.constant 0 : index
    %0 = vector.load %arg2[%c0, %c0_0] : memref<8x16xf32, #tpu.memory_space<vmem>>, vector<8x16xf32>
    %c0_1 = arith.constant 0 : index
    %c0_2 = arith.constant 0 : index
    %1 = vector.load %arg3[%c0_1, %c0_2] : memref<8x1xi32, #tpu.memory_space<vmem>>, vector<8x1xi32>
    %2 = tpu.iota {dimensions = array<i32: 1>} : vector<8x16xi32>
    %cst = arith.constant dense<0xFF800000> : vector<8xf32>
    %3 = vector.multi_reduction <maximumf>, %0, %cst [1] : vector<8x16xf32> to vector<8xf32>
    %4 = vector.shape_cast %3 : vector<8xf32> to vector<8x1xf32>
    %5 = vector.broadcast %4 : vector<8x1xf32> to vector<8x16xf32>
    %6 = arith.subf %0, %5 : vector<8x16xf32>
    %7 = math.exp %6 : vector<8x16xf32>
    %cst_3 = arith.constant dense<0.000000e+00> : vector<8xf32>
    %8 = vector.multi_reduction <add>, %7, %cst_3 [1] : vector<8x16xf32> to vector<8xf32>
    %9 = vector.shape_cast %8 : vector<8xf32> to vector<8x1xf32>
    %10 = math.log %9 : vector<8x1xf32>
    %11 = vector.broadcast %1 : vector<8x1xi32> to vector<8x16xi32>
    %12 = arith.cmpi eq, %2, %11 : vector<8x16xi32>
    %cst_4 = arith.constant 0.899999976 : f32
    %cst_5 = arith.constant 0.00666666683 : f32
    %13 = vector.broadcast %cst_4 : f32 to vector<8x16xf32>
    %14 = vector.broadcast %cst_5 : f32 to vector<8x16xf32>
    %15 = arith.select %12, %13, %14 : vector<8x16xi1>, vector<8x16xf32>
    %16 = arith.mulf %15, %6 : vector<8x16xf32>
    %cst_6 = arith.constant dense<0.000000e+00> : vector<8xf32>
    %17 = vector.multi_reduction <add>, %16, %cst_6 [1] : vector<8x16xf32> to vector<8xf32>
    %18 = vector.shape_cast %17 : vector<8xf32> to vector<8x1xf32>
    %19 = arith.subf %10, %18 : vector<8x1xf32>
    %c0_i32 = arith.constant 0 : i32
    %20 = arith.cmpi eq, %arg1, %c0_i32 : i32
    %21 = arith.extui %20 : i1 to i32
    %c0_i32_7 = arith.constant 0 : i32
    %22 = arith.cmpi ne, %21, %c0_i32_7 : i32
    scf.if %22 {
      %cst_15 = arith.constant 0.000000e+00 : f32
      %31 = vector.broadcast %cst_15 : f32 to vector<1x1xf32>
      %c0_16 = arith.constant 0 : index
      %c0_17 = arith.constant 0 : index
      %32 = vector.load %arg5[%c0_16, %c0_17] : memref<1x1xf32, #tpu.memory_space<vmem>>, vector<1x1xf32>
      tpu.vector_store %arg5[%c0_16, %c0_17], %31 {strides = array<i32>} : memref<1x1xf32, #tpu.memory_space<vmem>>, vector<1x1xf32>,
    } else {
    }
    %c0_8 = arith.constant 0 : index
    %c0_9 = arith.constant 0 : index
    %23 = vector.load %arg5[%c0_8, %c0_9] : memref<1x1xf32, #tpu.memory_space<vmem>>, vector<1x1xf32>
    %cst_10 = arith.constant dense<0.000000e+00> : vector<1xf32>
    %24 = vector.multi_reduction <add>, %19, %cst_10 [0] : vector<8x1xf32> to vector<1xf32>
    %25 = vector.shape_cast %24 : vector<1xf32> to vector<1x1xf32>
    %26 = arith.addf %23, %25 : vector<1x1xf32>
    %c0_11 = arith.constant 0 : index
    %c0_12 = arith.constant 0 : index
    %27 = vector.load %arg5[%c0_11, %c0_12] : memref<1x1xf32, #tpu.memory_space<vmem>>, vector<1x1xf32>
    tpu.vector_store %arg5[%c0_11, %c0_12], %26 {strides = array<i32>} : memref<1x1xf32, #tpu.memory_space<vmem>>, vector<1x1xf32>,
    %c0_i32_13 = arith.constant 0 : i32
    %28 = arith.cmpi eq, %arg1, %c0_i32_13 : i32
    %29 = arith.extui %28 : i1 to i32
    %c0_i32_14 = arith.constant 0 : i32
    %30 = arith.cmpi ne, %29, %c0_i32_14 : i32
    scf.if %30 {
      %c0_15 = arith.constant 0 : index
      %c0_16 = arith.constant 0 : index
      %31 = vector.load %arg5[%c0_15, %c0_16] : memref<1x1xf32, #tpu.memory_space<vmem>>, vector<1x1xf32>
      %c0_17 = arith.constant 0 : index
      %c0_18 = arith.constant 0 : index
      %32 = vector.load %arg4[%c0_17, %c0_18] : memref<1x1xf32, #tpu.memory_space<vmem>>, vector<1x1xf32>
      tpu.vector_store %arg4[%c0_17, %c0_18], %31 {strides = array<i32>} : memref<1x1xf32, #tpu.memory_space<vmem>>, vector<1x1xf32>,
    } else {
    }
    return
  }
  func.func @transform_0(%arg0: i32, %arg1: i32) -> (i32, i32) {
    %c1_i32 = arith.constant 1 : i32
    %0 = arith.muli %arg0, %c1_i32 : i32
    %1 = arith.addi %0, %arg1 : i32
    %c0_i32 = arith.constant 0 : i32
    %c0_i32_0 = arith.constant 0 : i32
    return %1, %c0_i32 : i32, i32
  }
  func.func @transform_1(%arg0: i32, %arg1: i32) -> (i32, i32) {
    %c1_i32 = arith.constant 1 : i32
    %0 = arith.muli %arg0, %c1_i32 : i32
    %1 = arith.addi %0, %arg1 : i32
    %c0_i32 = arith.constant 0 : i32
    %c0_i32_0 = arith.constant 0 : i32
    return %1, %c0_i32 : i32, i32
  }
  func.func @transform_2(%arg0: i32, %arg1: i32) -> (i32, i32) {
    %c0_i32 = arith.constant 0 : i32
    %c0_i32_0 = arith.constant 0 : i32
    return %arg0, %c0_i32 : i32, i32
  }
}

</mosaic_0001>

<llo_original>
// kernel: tpu_custom_call.1
$region0: #{tpu_custom_call.1}
  #allocation0 [shape = 'u32[]', space=smem, size = 0x4, offset = 0x4, fixed_abs, tag = 'smem constant byte address 0x4 - core index']
  #allocation1 [shape = 'u32[144,128]{1,0:T(1,128)}', space=vmem, size = 0x12000, scoped, tag = 'internal scratch']
  #allocation2 [shape = 'f32[1,1]{1,0:T(1,128)}', space=vmem, size = 0x200, scoped, tag = 'scratch operand']
  %s0 = inlined_call_operand.vmem [shape: f32[8,16], index: 0, kind: input, shape index: {}]
  %s1 = inlined_call_operand.vmem [shape: s32[8,1], index: 1, kind: input, shape index: {}]
  %s2 = inlined_call_operand.hbm [shape: f32[1,1], index: 2, kind: output, shape index: {}]
  %s3 = sld [smem:[#allocation0]]
  $region26: #{tpu_custom_call.1} parent=0
    _
  %s5 = ssub.s32 1, %s3
  %s6 = scalar_select 0, %s5, %s3
  $region1: #{tpu_custom_call.1} parent=0
    #allocation3 [shape = 'u8[512]{0}', space=vmem, size = 0x400, scoped, tag = 'output window, operand 0, single buffered']
    #allocation4 [shape = 's32[1]{0}', space=sflag, size = 0x4, scoped, tag = 'scoped memory for tpu_custom_call.1']
    %7 = vsyncpa [#allocation4], 0
    // Predicated region
    $region2: #{tpu_custom_call.1} parent=1 // pred_check
      _
    $region3: #{tpu_custom_call.1} parent=1 // pred_check_branch
      %9 = sbr.rel (0) target = $region5
    $region4: #{tpu_custom_call.1} parent=1 // pred_region
      %s10 = sadd.s32 0, 0
      %p11 = scmp.lt.s32.totalorder %s10, 0
      %s12 = scalar_select %p11, %s10, 0
      %s13 = smul.addr %s12, 8
      %s14 = scalar_lea.vmem %s0, %s13
      %s15 = sadd.s32 0, 0
    $region5: #{tpu_custom_call.1} parent=1 // pred_fallthru
      _
    // Predicated region
    $region6: #{tpu_custom_call.1} parent=1 // pred_check
      _
    $region7: #{tpu_custom_call.1} parent=1 // pred_check_branch
      %17 = sbr.rel (0) target = $region9
    $region8: #{tpu_custom_call.1} parent=1 // pred_region
      %s18 = sadd.s32 0, 0
      %p19 = scmp.lt.s32.totalorder %s18, 0
      %s20 = scalar_select %p19, %s18, 0
      %s21 = smul.addr %s20, 8
      %s22 = scalar_lea.vmem %s1, %s21
      %s23 = sadd.s32 0, 0
    $region9: #{tpu_custom_call.1} parent=1 // pred_fallthru
      _
    %s24 = sadd.s32 0, 0
    %p25 = scmp.lt.s32.totalorder %s24, 0
    %s26 = scalar_select %p25, %s24, 0
    %s27 = smul.addr %s26, 8
    %s28 = scalar_lea.vmem %s0, %s27
    %s29 = sadd.s32 0, 0
    %p30 = scmp.lt.s32.totalorder %s29, 0
    %s31 = scalar_select %p30, %s29, 0
    %s32 = smul.addr %s31, 8
    %s33 = scalar_lea.vmem %s1, %s32
    %s34 = sadd.s32 0, 0
    %p35 = scmp.lt.s32.totalorder %s34, 0
    %s36 = scalar_select %p35, %s34, 0
    %s37 = smul.addr %s36, 8
    %s38 = scalar_lea.vmem %s0, %s37
    %s39 = sadd.s32 0, 0
    %s40 = sadd.s32 0, 0
    %p41 = scmp.lt.s32.totalorder %s40, 0
    %s42 = scalar_select %p41, %s40, 0
    %s43 = smul.addr %s42, 8
    %s44 = scalar_lea.vmem %s1, %s43
    %s45 = sadd.s32 0, 0
    %v46 = vld [vmem:[%s38] sm:$0xff]
    %v47 = vld [vmem:[%s44] sm:$0xff]
    %v48 = vlaneseq
    %v49 = vand.u32 %v48, 127
    %vm50 = vcmask 130048
    %v51 = vsel %vm50, %v46, -inf
    %52 = vmax.xlane.f32.xlu0 %v51
    %v53 = vpop.xlane.xlu0 %52
    %v54 = vsub.f32 %v46, %v53
    %v55 = vmul.f32 %v54, 1.442695
    %v56 = vpow.pop %v55
    %v57 = vsel %vm50, %v56, 0.0
    %58 = vadd.xlane.f32.xlu0 %v57
    %v59 = vpop.xlane.xlu0 %58
    %v60 = vlog2.pop %v59
    %v61 = vmul.f32 %v60, 0.6931472
    %62 = vset.pattern.permute.xlu0 0
    %63 = vperm.xlu0 %62, %v47
    %v64 = vpop.permute.xlu0 %63
    %vm65 = vcmp.eq.s32.totalorder %v49, %v64
    %v66 = vsel %vm65, 0.9, 0.006666667
    %v67 = vmul.f32 %v66, %v54
    %v68 = vsel %vm50, %v67, 0.0
    %69 = vadd.xlane.f32.xlu0 %v68
    %v70 = vpop.xlane.xlu0 %69
    %v71 = vsub.f32 %v61, %v70
    %p72 = scmp.eq.s32.totalorder 0, 0
    // Predicated region
    $region10: #{tpu_custom_call.1} parent=1 // pred_check
      %p73 = pneg %p72
    $region11: #{tpu_custom_call.1} parent=1 // pred_check_branch
      %75 = sbr.rel (%p73) target = $region13
    $region12: #{tpu_custom_call.1} parent=1 // pred_region
      %vm76 = vcmask 0
      %77 = vst.msk [vmem:[#allocation2] sm:$0x1] %vm76, 0.0
    $region13: #{tpu_custom_call.1} parent=1 // pred_fallthru
      _
    %v78 = vld [vmem:[#allocation2] sm:$0x1]
    %v79 = vrot.slane %v71, 4
    %v80 = vadd.f32 %v71, %v79
    %v81 = vrot.slane %v80, 2
    %v82 = vadd.f32 %v80, %v81
    %v83 = vrot.slane %v82, 1
    %v84 = vadd.f32 %v82, %v83
    %v85 = vadd.f32 %v78, %v84
    %vm86 = vcmask 0
    %87 = vst.msk [vmem:[#allocation2] sm:$0x1] %vm86, %v85
    // Predicated region
    $region14: #{tpu_custom_call.1} parent=1 // pred_check
      %p88 = pneg %p72
    $region15: #{tpu_custom_call.1} parent=1 // pred_check_branch
      %90 = sbr.rel (%p88) target = $region17
    $region16: #{tpu_custom_call.1} parent=1 // pred_region
      %v91 = vld [vmem:[#allocation2] sm:$0x1]
      %92 = vst.msk [vmem:[#allocation3] sm:$0x1] %vm86, %v91
    $region17: #{tpu_custom_call.1} parent=1 // pred_fallthru
      _
    // Predicated region
    $region18: #{tpu_custom_call.1} parent=1 // pred_check
      _
    $region19: #{tpu_custom_call.1} parent=1 // pred_check_branch
      %94 = sbr.rel (0) target = $region21
    $region20: #{tpu_custom_call.1} parent=1 // pred_region
      %s96 = ssub.s32 16, 16
      %97 = vsyncadd [#allocation4], %s96
      %s99 = sshll.u32 [#allocation3], 4
      %s100 = int_to_ptr.vmem [resolvable:$true] %s99
      %102 = dma.vmem_to_hbm [thread:$0]  %s100, 16, %s2, [#allocation4]
    $region21: #{tpu_custom_call.1} parent=1 // pred_fallthru
      _
    // Predicated region
    $region22: #{tpu_custom_call.1} parent=1 // pred_check
      _
    $region23: #{tpu_custom_call.1} parent=1 // pred_check_branch
      %104 = sbr.rel (0) target = $region25
    $region24: #{tpu_custom_call.1} parent=1 // pred_region
      %105 = dma.done [#allocation4], 16
    $region25: #{tpu_custom_call.1} parent=1 // pred_fallthru
      _
    %106 = vsyncpa [#allocation4], 1

</llo_original>
